<compile_context>
chip_gen: v7x
topology: tpu7x:2x2x1
jax: 0.10.0
libtpu: 0.0.40
codegen_flags: <defaults>
</compile_context>

<pallas_src>
import math

import jax
import jax.numpy as jnp
from jax.experimental import pallas as pl
from jax.experimental.pallas import tpu as pltpu


def eltwise_kernel(x_ref, w_ref, o_ref):
    # x_ref: (TB, TN) tile, w_ref: (1, TN) tile -> broadcast multiply on the VPU.
    o_ref[...] = x_ref[...] * w_ref[...]


def _pick_batch_tile(B, itemsize, pref=512):
    # Sublane alignment: 8 for f32, 16 for bf16, 32 for int8.
    sub = 8 * max(1, 4 // itemsize)
    if B <= pref:
        return B  # block equal to full array dim is always legal
    return max(sub, (pref // sub) * sub)


def _pick_lane_tile(n, pref=2048):
    if n <= pref:
        return n  # full dim (legal even if < 128 / not a multiple of 128)
    return pref  # multiple of 128; Pallas masks the partial last block


def _eltwise_pallas(x, weights):
    B, n = x.shape
    itemsize = jnp.dtype(x.dtype).itemsize
    TB = _pick_batch_tile(B, itemsize)
    TN = _pick_lane_tile(n)
    grid = (pl.cdiv(B, TB), pl.cdiv(n, TN))

    return pl.pallas_call(
        eltwise_kernel,
        out_shape=jax.ShapeDtypeStruct((B, n), x.dtype),
        grid_spec=pl.GridSpec(
            grid=grid,
            in_specs=[
                pl.BlockSpec((TB, TN), lambda i, j: (i, j)),   # x tile
                pl.BlockSpec((1, TN), lambda i, j: (0, j)),    # weights: broadcast over batch
            ],
            out_specs=pl.BlockSpec((TB, TN), lambda i, j: (i, j)),
        ),
        cost_estimate=pl.CostEstimate(
            flops=B * n,
            transcendentals=0,
            bytes_accessed=(2 * B * n + n) * itemsize,
        ),
        compiler_params=pltpu.CompilerParams(
            dimension_semantics=("parallel", "parallel"),  # elementwise -> both axes parallel
            vmem_limit_bytes=32 * 1024 * 1024,
        ),
    )(x, weights)


def eltwise_layer(x, weights):
    """Pallas implementation of EltwiseLayer.forward: x * weights (weights shape (1, n))."""
    B, n = x.shape
    assert weights.shape == (1, n)

    # Lane-dense packing for narrow n: fold k batch rows into one kernel row so the last
    # dim is a multiple of 128 (unmasked vector stores). Only when B divides evenly; the
    # reshape is a free row-major view and the tiled weight row stays tiny.
    if n < 128:
        k = 128 // math.gcd(n, 128)
        if k > 1 and B >= k and B % k == 0:
            x_packed = x.reshape(B // k, k * n)
            w_packed = jnp.tile(weights, (1, k))
            out = _eltwise_pallas(x_packed, w_packed)
            return out.reshape(B, n)

    return _eltwise_pallas(x, weights)


if __name__ == "__main__":
    key = jax.random.PRNGKey(0)
    k1, k2 = jax.random.split(key)

    # Small shape consistent with the module's (batch, n) input.
    B, n = 2, 32
    x = jax.random.normal(k1, (B, n), dtype=jnp.float32)
    # Module initializes weights as torch.ones([1, n]); perturb deterministically so the
    # multiply is non-trivial while remaining reproducible.
    weights = jnp.ones((1, n), dtype=jnp.float32) + 0.1 * jnp.arange(n, dtype=jnp.float32)[None, :]

    out = eltwise_layer(x, weights)
    jax.block_until_ready(out)
    assert out.shape == (B, n)
    assert jnp.allclose(out, x * weights, atol=1e-6, rtol=1e-6)

    # Second shape exercising the lane-dense packed path (B=8, n=32 -> kernel sees (2, 128)).
    B2, n2 = 8, 32
    x2 = jax.random.normal(k2, (B2, n2), dtype=jnp.float32)
    w2 = 0.5 * jnp.ones((1, n2), dtype=jnp.float32) + 0.01 * jnp.arange(n2, dtype=jnp.float32)[None, :]
    out2 = eltwise_layer(x2, w2)
    jax.block_until_ready(out2)
    assert out2.shape == (B2, n2)
    assert jnp.allclose(out2, x2 * w2, atol=1e-6, rtol=1e-6)

    print("KERNEL_OK")
</pallas_src>

<mosaic_0001>
module attributes {stable_mosaic.version = 11 : i64} {
  func.func @eltwise_kernel(%arg0: i32, %arg1: i32, %arg2: memref<2x32xf32, #tpu.memory_space<vmem>>, %arg3: memref<1x32xf32, #tpu.memory_space<vmem>>, %arg4: memref<2x32xf32, #tpu.memory_space<vmem>>) attributes {dimension_semantics = [#tpu.dimension_semantics<parallel>, #tpu.dimension_semantics<parallel>], iteration_bounds = array<i64: 1, 1>, scalar_prefetch = 0 : i64, scratch_operands = 0 : i64, tpu.core_type = #tpu.core_type<tc>, window_params = [{transform_indices = @transform_0, window_bounds = array<i64: 2, 32>}, {transform_indices = @transform_1, window_bounds = array<i64: 1, 32>}, {transform_indices = @transform_2, window_bounds = array<i64: 2, 32>}]} {
    %c0 = arith.constant 0 : index
    %c0_0 = arith.constant 0 : index
    %0 = vector.load %arg2[%c0, %c0_0] : memref<2x32xf32, #tpu.memory_space<vmem>>, vector<2x32xf32>
    %c0_1 = arith.constant 0 : index
    %c0_2 = arith.constant 0 : index
    %1 = vector.load %arg3[%c0_1, %c0_2] : memref<1x32xf32, #tpu.memory_space<vmem>>, vector<1x32xf32>
    %2 = vector.broadcast %1 : vector<1x32xf32> to vector<2x32xf32>
    %3 = arith.mulf %0, %2 : vector<2x32xf32>
    %c0_3 = arith.constant 0 : index
    %c0_4 = arith.constant 0 : index
    %4 = vector.load %arg4[%c0_3, %c0_4] : memref<2x32xf32, #tpu.memory_space<vmem>>, vector<2x32xf32>
    tpu.vector_store %arg4[%c0_3, %c0_4], %3 {strides = array<i32>} : memref<2x32xf32, #tpu.memory_space<vmem>>, vector<2x32xf32>,
    return
  }
  func.func @transform_0(%arg0: i32, %arg1: i32) -> (i32, i32) {
    %c0_i32 = arith.constant 0 : i32
    return %arg0, %arg1 : i32, i32
  }
  func.func @transform_1(%arg0: i32, %arg1: i32) -> (i32, i32) {
    %c0_i32 = arith.constant 0 : i32
    %c0_i32_0 = arith.constant 0 : i32
    return %c0_i32, %arg1 : i32, i32
  }
  func.func @transform_2(%arg0: i32, %arg1: i32) -> (i32, i32) {
    %c0_i32 = arith.constant 0 : i32
    return %arg0, %arg1 : i32, i32
  }
}

</mosaic_0001>

<llo_original>
// kernel: tpu_custom_call.1
$region0: #{tpu_custom_call.1}
  #allocation0 [shape = 'u32[]', space=smem, size = 0x4, offset = 0x4, fixed_abs, tag = 'smem constant byte address 0x4 - core index']
  #allocation1 [shape = 'u32[144,128]{1,0:T(1,128)}', space=vmem, size = 0x12000, scoped, tag = 'internal scratch']
  %s0 = inlined_call_operand.hbm [shape: f32[2,32], index: 0, kind: input, shape index: {}]
  %s1 = inlined_call_operand.vmem [shape: f32[1,32], index: 1, kind: input, shape index: {}]
  %s2 = inlined_call_operand.hbm [shape: f32[2,32], index: 2, kind: output, shape index: {}]
  %s3 = sld [smem:[#allocation0]]
  $region22: #{tpu_custom_call.1} parent=0
    _
  %s5 = ssub.s32 1, %s3
  %s6 = scalar_select 0, %s5, %s3
  $region1: #{tpu_custom_call.1} parent=0
    #allocation2 [shape = 'u8[1024]{0}', space=vmem, size = 0x400, scoped, tag = 'input window, operand 0, single buffered']
    #allocation3 [shape = 's32[1]{0}', space=sflag, size = 0x4, scoped, tag = 'scoped memory for tpu_custom_call.1']
    #allocation4 [shape = 's32[1]{0}', space=sflag, size = 0x4, scoped, tag = 'scoped memory for tpu_custom_call.1']
    #allocation5 [shape = 'u8[1024]{0}', space=vmem, size = 0x400, scoped, tag = 'output window, operand 0, single buffered']
    %7 = vsyncpa [#allocation3], 0
    %8 = vsyncpa [#allocation4], 0
    // Predicated region
    $region2: #{tpu_custom_call.1} parent=1 // pred_check
      _
    $region3: #{tpu_custom_call.1} parent=1 // pred_check_branch
      %10 = sbr.rel (0) target = $region5
    $region4: #{tpu_custom_call.1} parent=1 // pred_region
      %s12 = ssub.s32 32, 32
      %13 = vsyncadd [#allocation3], %s12
      %s15 = sshll.u32 [#allocation2], 4
      %s16 = int_to_ptr.vmem [resolvable:$true] %s15
      %18 = dma.hbm_to_vmem [thread:$0]  %s0, 32, %s16, [#allocation3]
    $region5: #{tpu_custom_call.1} parent=1 // pred_fallthru
      _
    // Predicated region
    $region6: #{tpu_custom_call.1} parent=1 // pred_check
      _
    $region7: #{tpu_custom_call.1} parent=1 // pred_check_branch
      %20 = sbr.rel (0) target = $region9
    $region8: #{tpu_custom_call.1} parent=1 // pred_region
      _
    $region9: #{tpu_custom_call.1} parent=1 // pred_fallthru
      _
    // Predicated region
    $region10: #{tpu_custom_call.1} parent=1 // pred_check
      _
    $region11: #{tpu_custom_call.1} parent=1 // pred_check_branch
      %22 = sbr.rel (0) target = $region13
    $region12: #{tpu_custom_call.1} parent=1 // pred_region
      %23 = dma.done [#allocation3], 32
    $region13: #{tpu_custom_call.1} parent=1 // pred_fallthru
      _
    %v24 = vld [vmem:[#allocation2] sm:$0x3]
    %v25 = vld [vmem:[%s1] sm:$0x1]
    %v27 = vlaneseq
    %v28 = vshrl.u32 %v27, 7
    %v29 = vsub.s32 0, %v28
    %v30 = vrot.slane %v25, %v29
    %v32 = vmul.f32 %v24, %v30
    %vm33 = vcmask 254976
    %34 = vst.msk [vmem:[#allocation5] sm:$0x3] %vm33, %v32
    // Predicated region
    $region14: #{tpu_custom_call.1} parent=1 // pred_check
      _
    $region15: #{tpu_custom_call.1} parent=1 // pred_check_branch
      %36 = sbr.rel (0) target = $region17
    $region16: #{tpu_custom_call.1} parent=1 // pred_region
      %s38 = ssub.s32 32, 32
      %39 = vsyncadd [#allocation4], %s38
      %s41 = sshll.u32 [#allocation5], 4
      %s42 = int_to_ptr.vmem [resolvable:$true] %s41
      %44 = dma.vmem_to_hbm [thread:$0]  %s42, 32, %s2, [#allocation4]
    $region17: #{tpu_custom_call.1} parent=1 // pred_fallthru
      _
    // Predicated region
    $region18: #{tpu_custom_call.1} parent=1 // pred_check
      _
    $region19: #{tpu_custom_call.1} parent=1 // pred_check_branch
      %46 = sbr.rel (0) target = $region21
    $region20: #{tpu_custom_call.1} parent=1 // pred_region
      %47 = dma.done [#allocation4], 32
    $region21: #{tpu_custom_call.1} parent=1 // pred_fallthru
      _
    %48 = vsyncpa [#allocation3], 1
    %49 = vsyncpa [#allocation4], 1

</llo_original>
